<compile_context>
chip_gen: v5e
topology: v5e:2x2
jax: 0.10.0
libtpu: 0.0.40
codegen_flags: <defaults>
</compile_context>

<pallas_src>
import jax
import jax.numpy as jnp
from jax.experimental import pallas as pl
from jax.experimental.pallas import tpu as pltpu

LANE = 128          # TPU lane width: hidden/output dims padded to multiples of this
SUBLANE = 16        # batch tile rows: multiple of 16 for clean bf16 sublane packing
MAX_TM = 512        # max batch-tile rows (85%+ of HBM roofline per tiled sweeps)


def _mlp_kernel(x_ref, w1_ref, b1_ref, w2_ref, b2_ref, o_ref):
    # x tile arrives in f32; cast to bf16 on the VPU right before the MXU dot
    # (hides under MXU slack, avoids an extra wrapper-side cast pass over x).
    x_bf = x_ref[...].astype(jnp.bfloat16)
    # hidden = relu(x @ W1 + b1); bf16 MXU inputs, f32 accumulation
    h = jnp.dot(x_bf, w1_ref[...], preferred_element_type=jnp.float32)
    h = jnp.maximum(h + b1_ref[...], 0.0)          # bias + ReLU in f32 on the VPU
    # y = hidden @ W2 + b2 (W2/b2 already lane-dense padded)
    y = jnp.dot(h.astype(jnp.bfloat16), w2_ref[...],
                preferred_element_type=jnp.float32)
    o_ref[...] = (y + b2_ref[...]).astype(o_ref.dtype)


def _vmem_capacity_bytes():
    try:
        return int(pltpu.get_tpu_info().vmem_capacity_bytes)
    except Exception:
        return 64 * 1024 * 1024   # v7x per-TC VMEM: safe floor across generations


def prepare_params(w1, b1, w2, b2):
    """One-time parameter prep (do NOT call per forward).

    w1: [n_input, n_hidden]; b1: [n_hidden]; w2: [n_hidden, n_output]; b2: [n_output]
    Weights are stored [in_features, out_features] (transposed vs. PyTorch) so
    both matmuls are plain `x @ W + b` on the MXU.
    """
    n_input, n_hidden = w1.shape
    n_output = w2.shape[1]
    n_hid_pad = pl.cdiv(n_hidden, LANE) * LANE
    n_out_pad = pl.cdiv(n_output, LANE) * LANE

    # bf16 MXU weights, f32 biases; zero-padding keeps the math exact:
    # padded hidden cols -> relu(0 + 0) = 0 -> multiplied by zero-padded W2 rows.
    w1_bf = jnp.pad(w1.astype(jnp.bfloat16),
                    ((0, 0), (0, n_hid_pad - n_hidden)))
    b1_2d = jnp.pad(b1.reshape(1, n_hidden).astype(jnp.float32),
                    ((0, 0), (0, n_hid_pad - n_hidden)))
    w2_bf = jnp.pad(w2.astype(jnp.bfloat16),
                    ((0, n_hid_pad - n_hidden), (0, n_out_pad - n_output)))
    b2_2d = jnp.pad(b2.reshape(1, n_output).astype(jnp.float32),
                    ((0, 0), (0, n_out_pad - n_output)))

    return {"w1": w1_bf, "b1": b1_2d, "w2": w2_bf, "b2": b2_2d,
            "n_output": int(n_output)}


def classification_forward(x, params):
    """x: [B, n_input] (f32)  ->  [B, n_output] (x.dtype)"""
    B, n_input = x.shape
    w1p, b1p, w2p, b2p = params["w1"], params["b1"], params["w2"], params["b2"]
    n_output = params["n_output"]
    n_hid_pad = w1p.shape[1]
    n_out_pad = w2p.shape[1]
    out_itemsize = jnp.dtype(x.dtype).itemsize

    # ---- generation-adaptive VMEM budget -------------------------------------
    vmem_cap = _vmem_capacity_bytes()            # 128 MiB v5e/v6e, 64 MiB v7x
    vmem_budget = int(vmem_cap * 0.75)           # headroom for compiler scratch

    # single-buffered weight/bias footprint (bf16 weights, f32 biases)
    weight_bytes = (w1p.size + w2p.size) * 2 + (b1p.size + b2p.size) * 4

    # per-batch-row footprint:
    #   2x x tile (f32, double-buffered) + in-kernel bf16 copy of x
    #   2x out tile (double-buffered)    + f32 y intermediate
    #   h intermediate in f32 + its bf16 copy
    per_row = (2 * n_input * 4 + n_input * 2
               + 2 * n_out_pad * out_itemsize + n_out_pad * 4
               + n_hid_pad * (4 + 2))
    avail = max(vmem_budget - weight_bytes, SUBLANE * per_row)
    tm_cap = max(SUBLANE, (avail // per_row) // SUBLANE * SUBLANE)

    # ---- even batch tiling (avoid a whole wasted last tile) -------------------
    b_rounded = pl.cdiv(B, SUBLANE) * SUBLANE
    max_tm = min(MAX_TM, tm_cap, b_rounded)
    max_tm = max(SUBLANE, (max_tm // SUBLANE) * SUBLANE)
    n_tiles = pl.cdiv(b_rounded, max_tm)
    tm = pl.cdiv(pl.cdiv(b_rounded, n_tiles), SUBLANE) * SUBLANE
    b_pad = n_tiles * tm

    x_p = x if b_pad == B else jnp.pad(x, ((0, b_pad - B), (0, 0)))

    # ---- compiler params / cost estimate --------------------------------------
    est_bytes = weight_bytes + tm * per_row
    vmem_limit = int(min(vmem_cap, max(2 * est_bytes, 32 * 1024 * 1024)))

    flops = 2 * b_pad * (n_input * n_hid_pad + n_hid_pad * n_out_pad)
    bytes_accessed = (b_pad * n_input * jnp.dtype(x.dtype).itemsize
                      + weight_bytes
                      + b_pad * n_out_pad * out_itemsize)
    cost = pl.CostEstimate(flops=flops, transcendentals=0,
                           bytes_accessed=bytes_accessed)

    out = pl.pallas_call(
        _mlp_kernel,
        out_shape=jax.ShapeDtypeStruct((b_pad, n_out_pad), x.dtype),
        grid=(b_pad // tm,),
        in_specs=[
            # x tile marches down the batch (double-buffered by the pipeline)
            pl.BlockSpec((tm, n_input), lambda i: (i, 0)),
            # weights/biases: constant index_map -> single-buffer (halve VMEM)
            pl.BlockSpec((n_input, n_hid_pad), lambda i: (0, 0),
                         pipeline_mode=pl.Buffered(1)),
            pl.BlockSpec((1, n_hid_pad), lambda i: (0, 0),
                         pipeline_mode=pl.Buffered(1)),
            pl.BlockSpec((n_hid_pad, n_out_pad), lambda i: (0, 0),
                         pipeline_mode=pl.Buffered(1)),
            pl.BlockSpec((1, n_out_pad), lambda i: (0, 0),
                         pipeline_mode=pl.Buffered(1)),
        ],
        out_specs=pl.BlockSpec((tm, n_out_pad), lambda i: (i, 0)),
        compiler_params=pltpu.CompilerParams(
            # batch axis is independent -> shard across v7x's two TensorCores
            dimension_semantics=("parallel",),
            vmem_limit_bytes=vmem_limit,
        ),
        cost_estimate=cost,
    )(x_p, w1p, b1p, w2p, b2p)

    # slice padded batch rows / padded output lanes back to the module contract
    return out[:B, :n_output]


if __name__ == "__main__":
    # Shapes consistent with the module: n_input=16, n_hidden=32, n_output=4, batch=8
    B, n_input, n_hidden, n_output = 8, 16, 32, 4

    key = jax.random.PRNGKey(0)
    kx, k1, k2, k3, k4 = jax.random.split(key, 5)

    x = jax.random.normal(kx, (B, n_input), dtype=jnp.float32)

    # Deterministic parameter init (PyTorch Linear-style uniform bounds).
    bound1 = 1.0 / (n_input ** 0.5)
    w1 = jax.random.uniform(k1, (n_input, n_hidden), jnp.float32, -bound1, bound1)
    b1 = jax.random.uniform(k2, (n_hidden,), jnp.float32, -bound1, bound1)
    bound2 = 1.0 / (n_hidden ** 0.5)
    w2 = jax.random.uniform(k3, (n_hidden, n_output), jnp.float32, -bound2, bound2)
    b2 = jax.random.uniform(k4, (n_output,), jnp.float32, -bound2, bound2)

    # One-time parameter prep (casts / padding hoisted out of the forward path).
    params = prepare_params(w1, b1, w2, b2)

    y = classification_forward(x, params)
    jax.block_until_ready(y)
    assert y.shape == (B, n_output)

    # Reference check (plain JAX with the same bf16 quantization of x / W1 / W2 / h).
    xq = x.astype(jnp.bfloat16).astype(jnp.float32)
    w1q = w1.astype(jnp.bfloat16).astype(jnp.float32)
    w2q = w2.astype(jnp.bfloat16).astype(jnp.float32)
    h_ref = jnp.maximum(xq @ w1q + b1, 0.0)
    y_ref = h_ref.astype(jnp.bfloat16).astype(jnp.float32) @ w2q + b2
    assert jnp.allclose(y, y_ref, atol=1e-2, rtol=1e-2)

    print("KERNEL_OK")
</pallas_src>

<mosaic_0001>
module attributes {stable_mosaic.version = 11 : i64} {
  func.func @_mlp_kernel(%arg0: i32, %arg1: memref<16x16xf32, #tpu.memory_space<vmem>>, %arg2: memref<16x128xbf16, #tpu.memory_space<vmem>>, %arg3: memref<1x128xf32, #tpu.memory_space<vmem>>, %arg4: memref<128x128xbf16, #tpu.memory_space<vmem>>, %arg5: memref<1x128xf32, #tpu.memory_space<vmem>>, %arg6: memref<16x128xf32, #tpu.memory_space<vmem>>) attributes {dimension_semantics = [#tpu.dimension_semantics<parallel>], iteration_bounds = array<i64: 1>, scalar_prefetch = 0 : i64, scratch_operands = 0 : i64, tpu.core_type = #tpu.core_type<tc>, window_params = [{transform_indices = @transform_0, window_bounds = array<i64: 16, 16>}, {pipeline_mode = #tpu.pipeline_mode<synchronous>, transform_indices = @transform_1, window_bounds = array<i64: 16, 128>}, {pipeline_mode = #tpu.pipeline_mode<synchronous>, transform_indices = @transform_2, window_bounds = array<i64: 1, 128>}, {pipeline_mode = #tpu.pipeline_mode<synchronous>, transform_indices = @transform_3, window_bounds = array<i64: 128, 128>}, {pipeline_mode = #tpu.pipeline_mode<synchronous>, transform_indices = @transform_4, window_bounds = array<i64: 1, 128>}, {transform_indices = @transform_5, window_bounds = array<i64: 16, 128>}]} {
    %c0 = arith.constant 0 : index
    %c0_0 = arith.constant 0 : index
    %0 = vector.load %arg1[%c0, %c0_0] : memref<16x16xf32, #tpu.memory_space<vmem>>, vector<16x16xf32>
    %1 = arith.truncf %0 : vector<16x16xf32> to vector<16x16xbf16>
    %c0_1 = arith.constant 0 : index
    %c0_2 = arith.constant 0 : index
    %2 = vector.load %arg2[%c0_1, %c0_2] : memref<16x128xbf16, #tpu.memory_space<vmem>>, vector<16x128xbf16>
    %cst = arith.constant dense<0.000000e+00> : vector<16x128xf32>
    %3 = tpu.matmul %1, %2, %cst {dimension_numbers = #tpu.dot_dimension_numbers<[1], [0], [0], [1], [0, 0, 1, 1], [], []>} : vector<16x16xbf16>, vector<16x128xbf16>, vector<16x128xf32> -> vector<16x128xf32>
    %c0_3 = arith.constant 0 : index
    %c0_4 = arith.constant 0 : index
    %4 = vector.load %arg3[%c0_3, %c0_4] : memref<1x128xf32, #tpu.memory_space<vmem>>, vector<1x128xf32>
    %5 = vector.broadcast %4 : vector<1x128xf32> to vector<16x128xf32>
    %6 = arith.addf %3, %5 : vector<16x128xf32>
    %cst_5 = arith.constant 0.000000e+00 : f32
    %7 = vector.broadcast %cst_5 : f32 to vector<16x128xf32>
    %8 = arith.maximumf %6, %7 : vector<16x128xf32>
    %9 = arith.truncf %8 : vector<16x128xf32> to vector<16x128xbf16>
    %c0_6 = arith.constant 0 : index
    %c0_7 = arith.constant 0 : index
    %10 = vector.load %arg4[%c0_6, %c0_7] : memref<128x128xbf16, #tpu.memory_space<vmem>>, vector<128x128xbf16>
    %cst_8 = arith.constant dense<0.000000e+00> : vector<16x128xf32>
    %11 = tpu.matmul %9, %10, %cst_8 {dimension_numbers = #tpu.dot_dimension_numbers<[1], [0], [0], [1], [0, 0, 1, 1], [], []>} : vector<16x128xbf16>, vector<128x128xbf16>, vector<16x128xf32> -> vector<16x128xf32>
    %c0_9 = arith.constant 0 : index
    %c0_10 = arith.constant 0 : index
    %12 = vector.load %arg5[%c0_9, %c0_10] : memref<1x128xf32, #tpu.memory_space<vmem>>, vector<1x128xf32>
    %13 = vector.broadcast %12 : vector<1x128xf32> to vector<16x128xf32>
    %14 = arith.addf %11, %13 : vector<16x128xf32>
    %c0_11 = arith.constant 0 : index
    %c0_12 = arith.constant 0 : index
    %15 = vector.load %arg6[%c0_11, %c0_12] : memref<16x128xf32, #tpu.memory_space<vmem>>, vector<16x128xf32>
    tpu.vector_store %arg6[%c0_11, %c0_12], %14 {strides = array<i32>} : memref<16x128xf32, #tpu.memory_space<vmem>>, vector<16x128xf32>,
    return
  }
  func.func @transform_0(%arg0: i32) -> (i32, i32) {
    %c0_i32 = arith.constant 0 : i32
    %c0_i32_0 = arith.constant 0 : i32
    return %arg0, %c0_i32 : i32, i32
  }
  func.func @transform_1(%arg0: i32) -> (i32, i32) {
    %c0_i32 = arith.constant 0 : i32
    %c0_i32_0 = arith.constant 0 : i32
    %c0_i32_1 = arith.constant 0 : i32
    return %c0_i32, %c0_i32_0 : i32, i32
  }
  func.func @transform_2(%arg0: i32) -> (i32, i32) {
    %c0_i32 = arith.constant 0 : i32
    %c0_i32_0 = arith.constant 0 : i32
    %c0_i32_1 = arith.constant 0 : i32
    return %c0_i32, %c0_i32_0 : i32, i32
  }
  func.func @transform_3(%arg0: i32) -> (i32, i32) {
    %c0_i32 = arith.constant 0 : i32
    %c0_i32_0 = arith.constant 0 : i32
    %c0_i32_1 = arith.constant 0 : i32
    return %c0_i32, %c0_i32_0 : i32, i32
  }
  func.func @transform_4(%arg0: i32) -> (i32, i32) {
    %c0_i32 = arith.constant 0 : i32
    %c0_i32_0 = arith.constant 0 : i32
    %c0_i32_1 = arith.constant 0 : i32
    return %c0_i32, %c0_i32_0 : i32, i32
  }
  func.func @transform_5(%arg0: i32) -> (i32, i32) {
    %c0_i32 = arith.constant 0 : i32
    %c0_i32_0 = arith.constant 0 : i32
    return %arg0, %c0_i32 : i32, i32
  }
}

</mosaic_0001>

<llo_original>
// kernel: tpu_custom_call.1
$region0: #{tpu_custom_call.1}
  #allocation0 [shape = 'u32[]', space=smem, size = 0x4, offset = 0x4, fixed_abs, tag = 'smem constant byte address 0x4 - core index']
  #allocation1 [shape = 'u32[72,128]{1,0:T(1,128)}', space=vmem, size = 0x9000, scoped, tag = 'internal scratch']
  %s0 = inlined_call_operand.hbm [shape: f32[16,16], index: 0, kind: input, shape index: {}]
  %s1 = inlined_call_operand.hbm [shape: bf16[16,128], index: 1, kind: input, shape index: {}]
  %s2 = inlined_call_operand.vmem [shape: f32[1,128], index: 2, kind: input, shape index: {}]
  %s3 = inlined_call_operand.hbm [shape: bf16[128,128], index: 3, kind: input, shape index: {}]
  %s4 = inlined_call_operand.vmem [shape: f32[1,128], index: 4, kind: input, shape index: {}]
  %s5 = inlined_call_operand.hbm [shape: f32[16,128], index: 5, kind: output, shape index: {}]
  %s6 = sld [smem:[#allocation0]]
  $region42: #{tpu_custom_call.1} parent=0
    _
  %s8 = ssub.s32 1, %s6
  %s9 = scalar_select 0, %s8, %s6
  $region1: #{tpu_custom_call.1} parent=0
    #allocation2 [shape = 'u8[8192]{0}', space=vmem, size = 0x2000, scoped, tag = 'input window, operand 0, single buffered']
    #allocation3 [shape = 's32[1]{0}', space=sflag, size = 0x4, scoped, tag = 'scoped memory for tpu_custom_call.1']
    #allocation4 [shape = 's32[1]{0}', space=sflag, size = 0x4, scoped, tag = 'scoped memory for tpu_custom_call.1']
    #allocation5 [shape = 'u8[4096]{0}', space=vmem, size = 0x1000, scoped, tag = 'input window, operand 1, single buffered']
    #allocation6 [shape = 's32[1]{0}', space=sflag, size = 0x4, scoped, tag = 'scoped memory for tpu_custom_call.1']
    #allocation7 [shape = 'u8[32768]{0}', space=vmem, size = 0x8000, scoped, tag = 'input window, operand 3, single buffered']
    #allocation8 [shape = 'u8[8192]{0}', space=vmem, size = 0x2000, scoped, tag = 'output window, operand 0, single buffered']
    %10 = vsyncpa [#allocation3], 0
    %11 = vsyncpa [#allocation6], 0
    %12 = vsyncpa [#allocation4], 0
    // Predicated region
    $region2: #{tpu_custom_call.1} parent=1 // pred_check
      _
    $region3: #{tpu_custom_call.1} parent=1 // pred_check_branch
      %14 = sbr.rel (0) target = $region5
    $region4: #{tpu_custom_call.1} parent=1 // pred_region
      %16 = vsyncadd [#allocation3], 0
      %s17 = sshll.u32 %s0, 4
      %s18 = int_to_ptr.hbm [resolvable:$true] %s17
      %s19 = sshll.u32 [#allocation2], 4
      %s20 = int_to_ptr.vmem [resolvable:$true] %s19
      %25 = dma.hbm_to_vmem [thread:$0]  %s18, 256, %s20, [#allocation3], 128, 128, 8
    $region5: #{tpu_custom_call.1} parent=1 // pred_fallthru
      _
    // Predicated region
    $region6: #{tpu_custom_call.1} parent=1 // pred_check
      _
    $region7: #{tpu_custom_call.1} parent=1 // pred_check_branch
      %27 = sbr.rel (0) target = $region9
    $region8: #{tpu_custom_call.1} parent=1 // pred_region
      %29 = vsyncadd [#allocation6], 0
      %s30 = sshll.u32 %s1, 4
      %s31 = int_to_ptr.hbm [resolvable:$true] %s30
      %s32 = sshll.u32 [#allocation5], 4
      %s33 = int_to_ptr.vmem [resolvable:$true] %s32
      %38 = dma.hbm_to_vmem [thread:$0]  %s31, 128, %s33, [#allocation6], 64, 64, 4
    $region9: #{tpu_custom_call.1} parent=1 // pred_fallthru
      _
    // Predicated region
    $region10: #{tpu_custom_call.1} parent=1 // pred_check
      _
    $region11: #{tpu_custom_call.1} parent=1 // pred_check_branch
      %40 = sbr.rel (0) target = $region13
    $region12: #{tpu_custom_call.1} parent=1 // pred_region
      _
    $region13: #{tpu_custom_call.1} parent=1 // pred_fallthru
      _
    // Predicated region
    $region14: #{tpu_custom_call.1} parent=1 // pred_check
      _
    $region15: #{tpu_custom_call.1} parent=1 // pred_check_branch
      %42 = sbr.rel (0) target = $region17
    $region16: #{tpu_custom_call.1} parent=1 // pred_region
      %44 = vsyncadd [#allocation6], 0
      %s45 = sshll.u32 %s3, 4
      %s46 = int_to_ptr.hbm [resolvable:$true] %s45
      %s47 = sshll.u32 [#allocation7], 4
      %s48 = int_to_ptr.vmem [resolvable:$true] %s47
      %53 = dma.hbm_to_vmem [thread:$0]  %s46, 1024, %s48, [#allocation6], 64, 64, 4
    $region17: #{tpu_custom_call.1} parent=1 // pred_fallthru
      _
    // Predicated region
    $region18: #{tpu_custom_call.1} parent=1 // pred_check
      _
    $region19: #{tpu_custom_call.1} parent=1 // pred_check_branch
      %55 = sbr.rel (0) target = $region21
    $region20: #{tpu_custom_call.1} parent=1 // pred_region
      _
    $region21: #{tpu_custom_call.1} parent=1 // pred_fallthru
      _
    // Predicated region
    $region22: #{tpu_custom_call.1} parent=1 // pred_check
      _
    $region23: #{tpu_custom_call.1} parent=1 // pred_check_branch
      %57 = sbr.rel (0) target = $region25
    $region24: #{tpu_custom_call.1} parent=1 // pred_region
      %59 = dma.done [#allocation3], 256
    $region25: #{tpu_custom_call.1} parent=1 // pred_fallthru
      _
    // Predicated region
    $region26: #{tpu_custom_call.1} parent=1 // pred_check
      _
    $region27: #{tpu_custom_call.1} parent=1 // pred_check_branch
      %61 = sbr.rel (0) target = $region29
    $region28: #{tpu_custom_call.1} parent=1 // pred_region
      %63 = dma.done [#allocation6], 128
    $region29: #{tpu_custom_call.1} parent=1 // pred_fallthru
      _
    // Predicated region
    $region30: #{tpu_custom_call.1} parent=1 // pred_check
      _
    $region31: #{tpu_custom_call.1} parent=1 // pred_check_branch
      %65 = sbr.rel (0) target = $region33
    $region32: #{tpu_custom_call.1} parent=1 // pred_region
      %67 = dma.done [#allocation6], 1024
    $region33: #{tpu_custom_call.1} parent=1 // pred_fallthru
      _
    %v69 = vld [vmem:[#allocation2] sm:$0xff]
    %v70 = vld [vmem:[#allocation2 + $0x8] sm:$0xff]
    %v71 = vpack.c.bf16 %v70, %v69
    %v72 = vld [vmem:[#allocation5] sm:$0xf]
    %v73 = vld [vmem:[#allocation5 + $0x4] sm:$0xf]
    %v74 = vld [vmem:[%s2] sm:$0x1]
    %v76 = vperm.slane %v74, 0
    %v80 = vunpack.c.l.b16 %v72
    %v81 = vunpack.c.l.b16 %v73
    %v82 = vpack.c.b16 %v81, %v80
    %vm84 = vcmask 130048
    %v86 = vsel %vm84, %v71, 0
    %88 = vmatpush.bf16.msra.mxu0 0
    %89 = vmatpush.bf16.msra.mxu0 0
    %90 = vmatpush.bf16.msra.mxu0 0
    %91 = vmatpush.bf16.msra.mxu0 0
    %92 = vmatpush.bf16.msra.mxu0 0
    %93 = vmatpush.bf16.msra.mxu0 0
    %94 = vmatpush.bf16.msra.mxu0 0
    %95 = vmatpush.bf16.msra.mxu0 %v82
    %96 = vmatmul.bf16.gmra.mxu0 %v86
    %v97 = vpop.f32.mrf.mxu0
    %v98 = vadd.f32 %v76, %v97
    %v99 = vpop.f32.mrf.mxu0
    %v100 = vadd.f32 %v76, %v99
    %101 = vdwg.mxu0
    %v102 = vmax.f32 %v98, 0.0
    %v103 = vmax.f32 %v100, 0.0
    %v104 = vpack.c.bf16 %v103, %v102
    %v105 = vld [vmem:[#allocation7] sm:$0xf]
    %v106 = vld [vmem:[#allocation7 + $0x4] sm:$0xf]
    %v107 = vld [vmem:[#allocation7 + $0x8] sm:$0xf]
    %v108 = vld [vmem:[#allocation7 + $0xc] sm:$0xf]
    %v109 = vld [vmem:[#allocation7 + $0x10] sm:$0xf]
    %v110 = vld [vmem:[#allocation7 + $0x14] sm:$0xf]
    %v111 = vld [vmem:[#allocation7 + $0x18] sm:$0xf]
    %v112 = vld [vmem:[#allocation7 + $0x1c] sm:$0xf]
    %v113 = vld [vmem:[#allocation7 + $0x20] sm:$0xf]
    %v114 = vld [vmem:[#allocation7 + $0x24] sm:$0xf]
    %v115 = vld [vmem:[#allocation7 + $0x28] sm:$0xf]
    %v116 = vld [vmem:[#allocation7 + $0x2c] sm:$0xf]
    %v117 = vld [vmem:[#allocation7 + $0x30] sm:$0xf]
    %v118 = vld [vmem:[#allocation7 + $0x34] sm:$0xf]
    %v119 = vld [vmem:[#allocation7 + $0x38] sm:$0xf]
    %v120 = vld [vmem:[#allocation7 + $0x3c] sm:$0xf]
    %v121 = vld [vmem:[%s4] sm:$0x1]
    %v123 = vperm.slane %v121, 0
    %v141 = vunpack.c.l.b16 %v105
    %v142 = vunpack.c.l.b16 %v106
    %v143 = vunpack.c.l.b16 %v107
    %v144 = vunpack.c.l.b16 %v108
    %v145 = vunpack.c.l.b16 %v109
    %v146 = vunpack.c.l.b16 %v110
    %v147 = vunpack.c.l.b16 %v111
    %v148 = vunpack.c.l.b16 %v112
    %v149 = vunpack.c.l.b16 %v113
    %v150 = vunpack.c.l.b16 %v114
    %v151 = vunpack.c.l.b16 %v115
    %v152 = vunpack.c.l.b16 %v116
    %v153 = vunpack.c.l.b16 %v117
    %v154 = vunpack.c.l.b16 %v118
    %v155 = vunpack.c.l.b16 %v119
    %v156 = vunpack.c.l.b16 %v120
    %v157 = vpack.c.b16 %v142, %v141
    %v158 = vpack.c.b16 %v144, %v143
    %v159 = vpack.c.b16 %v146, %v145
    %v160 = vpack.c.b16 %v148, %v147
    %v161 = vpack.c.b16 %v150, %v149
    %v162 = vpack.c.b16 %v152, %v151
    %v163 = vpack.c.b16 %v154, %v153
    %v164 = vpack.c.b16 %v156, %v155
    %173 = vmatpush.bf16.msra.mxu0 %v164
    %174 = vmatpush.bf16.msra.mxu0 %v163
    %175 = vmatpush.bf16.msra.mxu0 %v162
    %176 = vmatpush.bf16.msra.mxu0 %v161
    %177 = vmatpush.bf16.msra.mxu0 %v160
    %178 = vmatpush.bf16.msra.mxu0 %v159
    %179 = vmatpush.bf16.msra.mxu0 %v158
    %180 = vmatpush.bf16.msra.mxu0 %v157
    %181 = vmatmul.bf16.gmra.mxu0 %v104
    %v182 = vpop.f32.mrf.mxu0
    %v183 = vadd.f32 %v123, %v182
    %v184 = vpop.f32.mrf.mxu0
    %v185 = vadd.f32 %v123, %v184
    %186 = vdwg.mxu0
    %187 = vst [vmem:[#allocation8] sm:$0xff] %v183
    %188 = vst [vmem:[#allocation8 + $0x8] sm:$0xff] %v185
    // Predicated region
    $region34: #{tpu_custom_call.1} parent=1 // pred_check
      _
    $region35: #{tpu_custom_call.1} parent=1 // pred_check_branch
      %190 = sbr.rel (0) target = $region37
    $region36: #{tpu_custom_call.1} parent=1 // pred_region
      %192 = vsyncadd [#allocation4], 0
      %s193 = sshll.u32 [#allocation8], 4
      %s194 = int_to_ptr.vmem [resolvable:$true] %s193
      %s195 = sshll.u32 %s5, 4
      %s196 = int_to_ptr.hbm [resolvable:$true] %s195
      %201 = dma.vmem_to_hbm [thread:$0]  %s194, 256, %s196, [#allocation4], 128, 128, 8
    $region37: #{tpu_custom_call.1} parent=1 // pred_fallthru
      _
    // Predicated region
    $region38: #{tpu_custom_call.1} parent=1 // pred_check
      _
    $region39: #{tpu_custom_call.1} parent=1 // pred_check_branch
      %203 = sbr.rel (0) target = $region41
    $region40: #{tpu_custom_call.1} parent=1 // pred_region
      %205 = dma.done [#allocation4], 256
    $region41: #{tpu_custom_call.1} parent=1 // pred_fallthru
      _
    %206 = vsyncpa [#allocation3], 1
    %207 = vsyncpa [#allocation6], 1
    %208 = vsyncpa [#allocation4], 1

</llo_original>
